<compile_context>
chip_gen: v5e
topology: v5e:2x2
jax: 0.10.0
libtpu: 0.0.40
codegen_flags: <defaults>
</compile_context>

<pallas_src>
import jax
import jax.numpy as jnp
from jax.experimental import pallas as pl
from jax.experimental.pallas import tpu as pltpu


def _round_up(x, m):
    return ((x + m - 1) // m) * m


def decoder_kernel(z_ref, w1_ref, b1_ref, w2_ref, b2_ref, x_ref):
    # Layer 1: (TB, L) @ (L, H) with fp32 accumulation, +bias, ReLU.
    # Cast to the weight dtype only at the MXU input (no-op for fp32 weights;
    # deliberate low-precision MXU input when weights are bf16).
    h = jnp.dot(z_ref[...].astype(w1_ref.dtype), w1_ref[...],
                preferred_element_type=jnp.float32)
    h = jnp.maximum(h + b1_ref[...], 0.0)

    # Layer 2: (TB, H) @ (H, D_pad) with fp32 accumulation, +bias.
    o = jnp.dot(h.astype(w2_ref.dtype), w2_ref[...],
                preferred_element_type=jnp.float32)
    o = o + b2_ref[...]

    # sigmoid(x) = 1 / (1 + exp(-x)). Approx reciprocal stays on the EUP slot;
    # on v6e/v7x the EUP (not the MXU) is the saturating unit for this layer.
    x_ref[...] = pl.reciprocal(1.0 + jnp.exp(-o), approx=True).astype(x_ref.dtype)


def px_z_forward(z, w1, b1, w2, b2, *, block_b=256, weight_dtype=None):
    """Pallas implementation of Px_z.forward(z) = decoder(z).

    z  : (B, L)      fp32
    w1 : (L, H)      fp32   b1 : (1, H)
    w2 : (H, D_out)  fp32   b2 : (1, D_out)
    weight_dtype: optionally cast w1/w2 (e.g. jnp.bfloat16) for the MXU;
                  accumulation stays fp32, tolerance documented in __main__.
    """
    B, L = z.shape
    H = w1.shape[1]
    D_out = w2.shape[1]

    if weight_dtype is not None:
        w1 = w1.astype(weight_dtype)
        w2 = w2.astype(weight_dtype)

    # Lane-dense output: pad 784 -> 896 (multiple of 128). Padded weight
    # columns / bias entries are zero; padded output columns are sliced off.
    D_pad = _round_up(D_out, 128)
    if D_pad != D_out:
        w2 = jnp.pad(w2, ((0, 0), (0, D_pad - D_out)))
        b2 = jnp.pad(b2, ((0, 0), (0, D_pad - D_out)))

    # Batch tile: multiple of 8 sublanes (16 if 2-byte weights are in play).
    sublane = 16 if (weight_dtype is not None
                     and jnp.dtype(weight_dtype).itemsize == 2) else 8
    TB = min(block_b, _round_up(B, sublane))
    TB = _round_up(TB, sublane)
    B_pad = _round_up(B, TB)
    if B_pad != B:
        z = jnp.pad(z, ((0, B_pad - B), (0, 0)))

    grid = (B_pad // TB,)

    # Advisory cost hint for XLA's scheduler.
    flops = 2 * B_pad * (L * H + H * D_pad)
    transcendentals = 2 * B_pad * D_pad  # exp + reciprocal per output element
    bytes_accessed = (z.size * z.dtype.itemsize
                      + w1.size * w1.dtype.itemsize
                      + b1.size * b1.dtype.itemsize
                      + w2.size * w2.dtype.itemsize
                      + b2.size * b2.dtype.itemsize
                      + B_pad * D_pad * 4)

    out = pl.pallas_call(
        decoder_kernel,
        out_shape=jax.ShapeDtypeStruct((B_pad, D_pad), jnp.float32),
        grid_spec=pltpu.PrefetchScalarGridSpec(
            num_scalar_prefetch=0,
            grid=grid,
            in_specs=[
                pl.BlockSpec((TB, L), lambda i: (i, 0)),       # z: batch-tiled
                pl.BlockSpec((L, H), lambda i: (0, 0)),        # w1: resident
                pl.BlockSpec((1, H), lambda i: (0, 0)),        # b1: resident
                pl.BlockSpec((H, D_pad), lambda i: (0, 0)),    # w2: resident
                pl.BlockSpec((1, D_pad), lambda i: (0, 0)),    # b2: resident
            ],
            out_specs=pl.BlockSpec((TB, D_pad), lambda i: (i, 0)),
        ),
        compiler_params=pltpu.CompilerParams(
            dimension_semantics=("parallel",)),
        cost_estimate=pl.CostEstimate(
            flops=flops,
            transcendentals=transcendentals,
            bytes_accessed=bytes_accessed),
    )(z, w1, b1, w2, b2)

    # Slice off padded batch rows and padded output columns.
    return out[:B, :D_out]


if __name__ == "__main__":
    # Small, MNIST-consistent shapes.
    B = 8          # batch
    LATENT = 32    # z dimension
    HIDDEN = 128   # decoder hidden width
    D_OUT = 784    # 28*28 MNIST pixels (flattened)

    key = jax.random.PRNGKey(0)
    kz, k1, k2, k3, k4 = jax.random.split(key, 5)

    z = jax.random.normal(kz, (B, LATENT), dtype=jnp.float32)
    w1 = 0.05 * jax.random.normal(k1, (LATENT, HIDDEN), dtype=jnp.float32)
    b1 = 0.05 * jax.random.normal(k2, (1, HIDDEN), dtype=jnp.float32)
    w2 = 0.05 * jax.random.normal(k3, (HIDDEN, D_OUT), dtype=jnp.float32)
    b2 = 0.05 * jax.random.normal(k4, (1, D_OUT), dtype=jnp.float32)

    # Plain-JAX reference (exact sigmoid).
    ref = jax.nn.sigmoid(jnp.maximum(z @ w1 + b1, 0.0) @ w2 + b2)

    # fp32 weights. Tolerance accounts for the EUP approx-reciprocal sigmoid.
    x = px_z_forward(z, w1, b1, w2, b2)
    jax.block_until_ready(x)
    assert x.shape == (B, D_OUT)
    assert jnp.allclose(x, ref, atol=1e-2, rtol=1e-2)

    # bf16 weights (v6e/v7x fast path): fp32 accumulation, looser tolerance
    # because activations are deliberately cast to bf16 at the MXU input.
    x_bf16 = px_z_forward(z, w1, b1, w2, b2, weight_dtype=jnp.bfloat16)
    jax.block_until_ready(x_bf16)
    assert x_bf16.shape == (B, D_OUT)
    assert jnp.allclose(x_bf16, ref, atol=3e-2, rtol=3e-2)

    print("KERNEL_OK")
</pallas_src>

<mosaic_0001>
module attributes {stable_mosaic.version = 11 : i64} {
  func.func @decoder_kernel(%arg0: i32, %arg1: memref<8x32xf32, #tpu.memory_space<vmem>>, %arg2: memref<32x128xf32, #tpu.memory_space<vmem>>, %arg3: memref<1x128xf32, #tpu.memory_space<vmem>>, %arg4: memref<128x896xf32, #tpu.memory_space<vmem>>, %arg5: memref<1x896xf32, #tpu.memory_space<vmem>>, %arg6: memref<8x896xf32, #tpu.memory_space<vmem>>) attributes {dimension_semantics = [#tpu.dimension_semantics<parallel>], iteration_bounds = array<i64: 1>, scalar_prefetch = 0 : i64, scratch_operands = 0 : i64, tpu.core_type = #tpu.core_type<tc>, window_params = [{transform_indices = @transform_0, window_bounds = array<i64: 8, 32>}, {pipeline_mode = #tpu.pipeline_mode<synchronous>, transform_indices = @transform_1, window_bounds = array<i64: 32, 128>}, {pipeline_mode = #tpu.pipeline_mode<synchronous>, transform_indices = @transform_2, window_bounds = array<i64: 1, 128>}, {pipeline_mode = #tpu.pipeline_mode<synchronous>, transform_indices = @transform_3, window_bounds = array<i64: 128, 896>}, {pipeline_mode = #tpu.pipeline_mode<synchronous>, transform_indices = @transform_4, window_bounds = array<i64: 1, 896>}, {transform_indices = @transform_5, window_bounds = array<i64: 8, 896>}]} {
    %c0 = arith.constant 0 : index
    %c0_0 = arith.constant 0 : index
    %0 = vector.load %arg1[%c0, %c0_0] : memref<8x32xf32, #tpu.memory_space<vmem>>, vector<8x32xf32>
    %c0_1 = arith.constant 0 : index
    %c0_2 = arith.constant 0 : index
    %1 = vector.load %arg2[%c0_1, %c0_2] : memref<32x128xf32, #tpu.memory_space<vmem>>, vector<32x128xf32>
    %cst = arith.constant dense<0.000000e+00> : vector<8x128xf32>
    %2 = tpu.matmul %0, %1, %cst {dimension_numbers = #tpu.dot_dimension_numbers<[1], [0], [0], [1], [0, 0, 1, 1], [], []>} : vector<8x32xf32>, vector<32x128xf32>, vector<8x128xf32> -> vector<8x128xf32>
    %c0_3 = arith.constant 0 : index
    %c0_4 = arith.constant 0 : index
    %3 = vector.load %arg3[%c0_3, %c0_4] : memref<1x128xf32, #tpu.memory_space<vmem>>, vector<1x128xf32>
    %4 = vector.broadcast %3 : vector<1x128xf32> to vector<8x128xf32>
    %5 = arith.addf %2, %4 : vector<8x128xf32>
    %cst_5 = arith.constant 0.000000e+00 : f32
    %6 = vector.broadcast %cst_5 : f32 to vector<8x128xf32>
    %7 = arith.maximumf %5, %6 : vector<8x128xf32>
    %c0_6 = arith.constant 0 : index
    %c0_7 = arith.constant 0 : index
    %8 = vector.load %arg4[%c0_6, %c0_7] : memref<128x896xf32, #tpu.memory_space<vmem>>, vector<128x896xf32>
    %cst_8 = arith.constant dense<0.000000e+00> : vector<8x896xf32>
    %9 = tpu.matmul %7, %8, %cst_8 {dimension_numbers = #tpu.dot_dimension_numbers<[1], [0], [0], [1], [0, 0, 1, 1], [], []>} : vector<8x128xf32>, vector<128x896xf32>, vector<8x896xf32> -> vector<8x896xf32>
    %c0_9 = arith.constant 0 : index
    %c0_10 = arith.constant 0 : index
    %10 = vector.load %arg5[%c0_9, %c0_10] : memref<1x896xf32, #tpu.memory_space<vmem>>, vector<1x896xf32>
    %11 = vector.broadcast %10 : vector<1x896xf32> to vector<8x896xf32>
    %12 = arith.addf %9, %11 : vector<8x896xf32>
    %cst_11 = arith.constant 0.000000e+00 : f32
    %13 = vector.broadcast %cst_11 : f32 to vector<8x896xf32>
    %14 = arith.subf %13, %12 : vector<8x896xf32>
    %15 = math.exp %14 : vector<8x896xf32>
    %cst_12 = arith.constant 1.000000e+00 : f32
    %16 = vector.broadcast %cst_12 : f32 to vector<8x896xf32>
    %17 = arith.addf %16, %15 : vector<8x896xf32>
    %18 = tpu.reciprocal %17 {approx = true} : vector<8x896xf32> -> vector<8x896xf32>
    %c0_13 = arith.constant 0 : index
    %c0_14 = arith.constant 0 : index
    %19 = vector.load %arg6[%c0_13, %c0_14] : memref<8x896xf32, #tpu.memory_space<vmem>>, vector<8x896xf32>
    tpu.vector_store %arg6[%c0_13, %c0_14], %18 {strides = array<i32>} : memref<8x896xf32, #tpu.memory_space<vmem>>, vector<8x896xf32>,
    return
  }
  func.func @transform_0(%arg0: i32) -> (i32, i32) {
    %c0_i32 = arith.constant 0 : i32
    %c0_i32_0 = arith.constant 0 : i32
    return %arg0, %c0_i32 : i32, i32
  }
  func.func @transform_1(%arg0: i32) -> (i32, i32) {
    %c0_i32 = arith.constant 0 : i32
    %c0_i32_0 = arith.constant 0 : i32
    %c0_i32_1 = arith.constant 0 : i32
    return %c0_i32, %c0_i32_0 : i32, i32
  }
  func.func @transform_2(%arg0: i32) -> (i32, i32) {
    %c0_i32 = arith.constant 0 : i32
    %c0_i32_0 = arith.constant 0 : i32
    %c0_i32_1 = arith.constant 0 : i32
    return %c0_i32, %c0_i32_0 : i32, i32
  }
  func.func @transform_3(%arg0: i32) -> (i32, i32) {
    %c0_i32 = arith.constant 0 : i32
    %c0_i32_0 = arith.constant 0 : i32
    %c0_i32_1 = arith.constant 0 : i32
    return %c0_i32, %c0_i32_0 : i32, i32
  }
  func.func @transform_4(%arg0: i32) -> (i32, i32) {
    %c0_i32 = arith.constant 0 : i32
    %c0_i32_0 = arith.constant 0 : i32
    %c0_i32_1 = arith.constant 0 : i32
    return %c0_i32, %c0_i32_0 : i32, i32
  }
  func.func @transform_5(%arg0: i32) -> (i32, i32) {
    %c0_i32 = arith.constant 0 : i32
    %c0_i32_0 = arith.constant 0 : i32
    return %arg0, %c0_i32 : i32, i32
  }
}

</mosaic_0001>

<llo_original>
// kernel: tpu_custom_call.1
$region0: #{tpu_custom_call.1}
  #allocation0 [shape = 'u32[]', space=smem, size = 0x4, offset = 0x4, fixed_abs, tag = 'smem constant byte address 0x4 - core index']
  #allocation1 [shape = 'u32[72,128]{1,0:T(1,128)}', space=vmem, size = 0x9000, scoped, tag = 'internal scratch']
  %s0 = inlined_call_operand.hbm [shape: f32[8,32], index: 0, kind: input, shape index: {}]
  %s1 = inlined_call_operand.hbm [shape: f32[32,128], index: 1, kind: input, shape index: {}]
  %s2 = inlined_call_operand.vmem [shape: f32[1,128], index: 2, kind: input, shape index: {}]
  %s3 = inlined_call_operand.hbm [shape: f32[128,896], index: 3, kind: input, shape index: {}]
  %s4 = inlined_call_operand.hbm [shape: f32[1,896], index: 4, kind: input, shape index: {}]
  %s5 = inlined_call_operand.hbm [shape: f32[8,896], index: 5, kind: output, shape index: {}]
  %s6 = sld [smem:[#allocation0]]
  $region46: #{tpu_custom_call.1} parent=0
    _
  %s8 = ssub.s32 1, %s6
  %s9 = scalar_select 0, %s8, %s6
  $region1: #{tpu_custom_call.1} parent=0
    #allocation2 [shape = 'u8[4096]{0}', space=vmem, size = 0x1000, scoped, tag = 'input window, operand 0, single buffered']
    #allocation3 [shape = 's32[1]{0}', space=sflag, size = 0x4, scoped, tag = 'scoped memory for tpu_custom_call.1']
    #allocation4 [shape = 's32[1]{0}', space=sflag, size = 0x4, scoped, tag = 'scoped memory for tpu_custom_call.1']
    #allocation5 [shape = 'u8[16384]{0}', space=vmem, size = 0x4000, scoped, tag = 'input window, operand 1, single buffered']
    #allocation6 [shape = 's32[1]{0}', space=sflag, size = 0x4, scoped, tag = 'scoped memory for tpu_custom_call.1']
    #allocation7 [shape = 'u8[458752]{0}', space=vmem, size = 0x70000, scoped, tag = 'input window, operand 3, single buffered']
    #allocation8 [shape = 'u8[3584]{0}', space=vmem, size = 0x1000, scoped, tag = 'input window, operand 4, single buffered']
    #allocation9 [shape = 's32[1]{0}', space=sflag, size = 0x4, scoped, tag = 'scoped memory for tpu_custom_call.1']
    #allocation10 [shape = 'u8[28672]{0}', space=vmem, size = 0x7000, scoped, tag = 'output window, operand 0, single buffered']
    %10 = vsyncpa [#allocation3], 0
    %11 = vsyncpa [#allocation6], 0
    %12 = vsyncpa [#allocation9], 0
    %13 = vsyncpa [#allocation4], 0
    // Predicated region
    $region2: #{tpu_custom_call.1} parent=1 // pred_check
      _
    $region3: #{tpu_custom_call.1} parent=1 // pred_check_branch
      %15 = sbr.rel (0) target = $region5
    $region4: #{tpu_custom_call.1} parent=1 // pred_region
      %17 = vsyncadd [#allocation3], 0
      %s19 = sshll.u32 %s0, 4
      %s20 = int_to_ptr.hbm [resolvable:$true] %s19
      %s21 = sshll.u32 [#allocation2], 4
      %s22 = int_to_ptr.vmem [resolvable:$true] %s21
      %24 = dma.hbm_to_vmem [thread:$0]  %s20, 128, %s22, [#allocation3]
    $region5: #{tpu_custom_call.1} parent=1 // pred_fallthru
      _
    // Predicated region
    $region6: #{tpu_custom_call.1} parent=1 // pred_check
      _
    $region7: #{tpu_custom_call.1} parent=1 // pred_check_branch
      %26 = sbr.rel (0) target = $region9
    $region8: #{tpu_custom_call.1} parent=1 // pred_region
      %28 = vsyncadd [#allocation6], 0
      %s29 = sshll.u32 %s1, 4
      %s30 = int_to_ptr.hbm [resolvable:$true] %s29
      %s31 = sshll.u32 [#allocation5], 4
      %s32 = int_to_ptr.vmem [resolvable:$true] %s31
      %37 = dma.hbm_to_vmem [thread:$0]  %s30, 512, %s32, [#allocation6], 128, 128, 8
    $region9: #{tpu_custom_call.1} parent=1 // pred_fallthru
      _
    // Predicated region
    $region10: #{tpu_custom_call.1} parent=1 // pred_check
      _
    $region11: #{tpu_custom_call.1} parent=1 // pred_check_branch
      %39 = sbr.rel (0) target = $region13
    $region12: #{tpu_custom_call.1} parent=1 // pred_region
      _
    $region13: #{tpu_custom_call.1} parent=1 // pred_fallthru
      _
    // Predicated region
    $region14: #{tpu_custom_call.1} parent=1 // pred_check
      _
    $region15: #{tpu_custom_call.1} parent=1 // pred_check_branch
      %41 = sbr.rel (0) target = $region17
    $region16: #{tpu_custom_call.1} parent=1 // pred_region
      %43 = vsyncadd [#allocation6], 0
      %s44 = sshll.u32 %s3, 4
      %s45 = int_to_ptr.hbm [resolvable:$true] %s44
      %s46 = sshll.u32 [#allocation7], 4
      %s47 = int_to_ptr.vmem [resolvable:$true] %s46
      %52 = dma.hbm_to_vmem [thread:$0]  %s45, 14336, %s47, [#allocation6], 896, 896, 56
    $region17: #{tpu_custom_call.1} parent=1 // pred_fallthru
      _
    // Predicated region
    $region18: #{tpu_custom_call.1} parent=1 // pred_check
      _
    $region19: #{tpu_custom_call.1} parent=1 // pred_check_branch
      %54 = sbr.rel (0) target = $region21
    $region20: #{tpu_custom_call.1} parent=1 // pred_region
      %56 = vsyncadd [#allocation9], 0
      %s58 = sshll.u32 %s4, 4
      %s59 = int_to_ptr.hbm [resolvable:$true] %s58
      %s60 = sshll.u32 [#allocation8], 4
      %s61 = int_to_ptr.vmem [resolvable:$true] %s60
      %63 = dma.hbm_to_vmem [thread:$0]  %s59, 112, %s61, [#allocation9]
    $region21: #{tpu_custom_call.1} parent=1 // pred_fallthru
      _
    // Predicated region
    $region22: #{tpu_custom_call.1} parent=1 // pred_check
      _
    $region23: #{tpu_custom_call.1} parent=1 // pred_check_branch
      %65 = sbr.rel (0) target = $region25
    $region24: #{tpu_custom_call.1} parent=1 // pred_region
      %67 = dma.done [#allocation3], 128
    $region25: #{tpu_custom_call.1} parent=1 // pred_fallthru
      _
    // Predicated region
    $region26: #{tpu_custom_call.1} parent=1 // pred_check
      _
    $region27: #{tpu_custom_call.1} parent=1 // pred_check_branch
      %69 = sbr.rel (0) target = $region29
    $region28: #{tpu_custom_call.1} parent=1 // pred_region
      %71 = dma.done [#allocation6], 512
    $region29: #{tpu_custom_call.1} parent=1 // pred_fallthru
      _
    // Predicated region
    $region30: #{tpu_custom_call.1} parent=1 // pred_check
      _
    $region31: #{tpu_custom_call.1} parent=1 // pred_check_branch
      %73 = sbr.rel (0) target = $region33
    $region32: #{tpu_custom_call.1} parent=1 // pred_region
      %75 = dma.done [#allocation6], 14336
    $region33: #{tpu_custom_call.1} parent=1 // pred_fallthru
      _
    // Predicated region
    $region34: #{tpu_custom_call.1} parent=1 // pred_check
      _
    $region35: #{tpu_custom_call.1} parent=1 // pred_check_branch
      %77 = sbr.rel (0) target = $region37
    $region36: #{tpu_custom_call.1} parent=1 // pred_region
      %79 = dma.done [#allocation9], 112
    $region37: #{tpu_custom_call.1} parent=1 // pred_fallthru
      _
    %v80 = vld [vmem:[#allocation2] sm:$0xff]
    %v81 = vld [vmem:[#allocation5] sm:$0xff]
    %v82 = vld [vmem:[#allocation5 + $0x8] sm:$0xff]
    %v83 = vld [vmem:[#allocation5 + $0x10] sm:$0xff]
    %v84 = vld [vmem:[#allocation5 + $0x18] sm:$0xff]
    %v85 = vld [vmem:[%s2] sm:$0x1]
    %v87 = vperm.slane %v85, 0
    %vm89 = vcmask 261120
    %v91 = vsel %vm89, %v80, 0
    %93 = vmatpush.msra.mxu0 0.0
    %94 = vmatpush.msra.mxu0 0.0
    %95 = vmatpush.msra.mxu0 0.0
    %96 = vmatpush.msra.mxu0 0.0
    %97 = vmatpush.msra.mxu0 0.0
    %98 = vmatpush.msra.mxu0 0.0
    %99 = vmatpush.msra.mxu0 0.0
    %100 = vmatpush.msra.mxu0 0.0
    %101 = vmatpush.msra.mxu0 0.0
    %102 = vmatpush.msra.mxu0 0.0
    %103 = vmatpush.msra.mxu0 0.0
    %104 = vmatpush.msra.mxu0 0.0
    %105 = vmatpush.msra.mxu0 %v84
    %106 = vmatpush.msra.mxu0 %v83
    %107 = vmatpush.msra.mxu0 %v82
    %108 = vmatpush.msra.mxu0 %v81
    %109 = vmatmul.f32.gmra.mxu0 %v91
    %v110 = vpop.f32.mrf.mxu0
    %v111 = vadd.f32 %v87, %v110
    %112 = vdwg.mxu0
    %v113 = vmax.f32 %v111, 0.0
    %v114 = vld [vmem:[#allocation7] sm:$0xff]
    %v115 = vld [vmem:[#allocation7 + $0x8] sm:$0xff]
    %v116 = vld [vmem:[#allocation7 + $0x10] sm:$0xff]
    %v117 = vld [vmem:[#allocation7 + $0x18] sm:$0xff]
    %v118 = vld [vmem:[#allocation7 + $0x20] sm:$0xff]
    %v119 = vld [vmem:[#allocation7 + $0x28] sm:$0xff]
    %v120 = vld [vmem:[#allocation7 + $0x30] sm:$0xff]
    %v121 = vld [vmem:[#allocation7 + $0x38] sm:$0xff]
    %v122 = vld [vmem:[#allocation7 + $0x40] sm:$0xff]
    %v123 = vld [vmem:[#allocation7 + $0x48] sm:$0xff]
    %v124 = vld [vmem:[#allocation7 + $0x50] sm:$0xff]
    %v125 = vld [vmem:[#allocation7 + $0x58] sm:$0xff]
    %v126 = vld [vmem:[#allocation7 + $0x60] sm:$0xff]
    %v127 = vld [vmem:[#allocation7 + $0x68] sm:$0xff]
    %v128 = vld [vmem:[#allocation7 + $0x70] sm:$0xff]
    %v129 = vld [vmem:[#allocation7 + $0x78] sm:$0xff]
    %v130 = vld [vmem:[#allocation7 + $0x80] sm:$0xff]
    %v131 = vld [vmem:[#allocation7 + $0x88] sm:$0xff]
    %v132 = vld [vmem:[#allocation7 + $0x90] sm:$0xff]
    %v133 = vld [vmem:[#allocation7 + $0x98] sm:$0xff]
    %v134 = vld [vmem:[#allocation7 + $0xa0] sm:$0xff]
    %v135 = vld [vmem:[#allocation7 + $0xa8] sm:$0xff]
    %v136 = vld [vmem:[#allocation7 + $0xb0] sm:$0xff]
    %v137 = vld [vmem:[#allocation7 + $0xb8] sm:$0xff]
    %v138 = vld [vmem:[#allocation7 + $0xc0] sm:$0xff]
    %v139 = vld [vmem:[#allocation7 + $0xc8] sm:$0xff]
    %v140 = vld [vmem:[#allocation7 + $0xd0] sm:$0xff]
    %v141 = vld [vmem:[#allocation7 + $0xd8] sm:$0xff]
    %v142 = vld [vmem:[#allocation7 + $0xe0] sm:$0xff]
    %v143 = vld [vmem:[#allocation7 + $0xe8] sm:$0xff]
    %v144 = vld [vmem:[#allocation7 + $0xf0] sm:$0xff]
    %v145 = vld [vmem:[#allocation7 + $0xf8] sm:$0xff]
    %v146 = vld [vmem:[#allocation7 + $0x100] sm:$0xff]
    %v147 = vld [vmem:[#allocation7 + $0x108] sm:$0xff]
    %v148 = vld [vmem:[#allocation7 + $0x110] sm:$0xff]
    %v149 = vld [vmem:[#allocation7 + $0x118] sm:$0xff]
    %v150 = vld [vmem:[#allocation7 + $0x120] sm:$0xff]
    %v151 = vld [vmem:[#allocation7 + $0x128] sm:$0xff]
    %v152 = vld [vmem:[#allocation7 + $0x130] sm:$0xff]
    %v153 = vld [vmem:[#allocation7 + $0x138] sm:$0xff]
    %v154 = vld [vmem:[#allocation7 + $0x140] sm:$0xff]
    %v155 = vld [vmem:[#allocation7 + $0x148] sm:$0xff]
    %v156 = vld [vmem:[#allocation7 + $0x150] sm:$0xff]
    %v157 = vld [vmem:[#allocation7 + $0x158] sm:$0xff]
    %v158 = vld [vmem:[#allocation7 + $0x160] sm:$0xff]
    %v159 = vld [vmem:[#allocation7 + $0x168] sm:$0xff]
    %v160 = vld [vmem:[#allocation7 + $0x170] sm:$0xff]
    %v161 = vld [vmem:[#allocation7 + $0x178] sm:$0xff]
    %v162 = vld [vmem:[#allocation7 + $0x180] sm:$0xff]
    %v163 = vld [vmem:[#allocation7 + $0x188] sm:$0xff]
    %v164 = vld [vmem:[#allocation7 + $0x190] sm:$0xff]
    %v165 = vld [vmem:[#allocation7 + $0x198] sm:$0xff]
    %v166 = vld [vmem:[#allocation7 + $0x1a0] sm:$0xff]
    %v167 = vld [vmem:[#allocation7 + $0x1a8] sm:$0xff]
    %v168 = vld [vmem:[#allocation7 + $0x1b0] sm:$0xff]
    %v169 = vld [vmem:[#allocation7 + $0x1b8] sm:$0xff]
    %v170 = vld [vmem:[#allocation7 + $0x1c0] sm:$0xff]
    %v171 = vld [vmem:[#allocation7 + $0x1c8] sm:$0xff]
    %v172 = vld [vmem:[#allocation7 + $0x1d0] sm:$0xff]
    %v173 = vld [vmem:[#allocation7 + $0x1d8] sm:$0xff]
    %v174 = vld [vmem:[#allocation7 + $0x1e0] sm:$0xff]
    %v175 = vld [vmem:[#allocation7 + $0x1e8] sm:$0xff]
    %v176 = vld [vmem:[#allocation7 + $0x1f0] sm:$0xff]
    %v177 = vld [vmem:[#allocation7 + $0x1f8] sm:$0xff]
    %v178 = vld [vmem:[#allocation7 + $0x200] sm:$0xff]
    %v179 = vld [vmem:[#allocation7 + $0x208] sm:$0xff]
    %v180 = vld [vmem:[#allocation7 + $0x210] sm:$0xff]
    %v181 = vld [vmem:[#allocation7 + $0x218] sm:$0xff]
    %v182 = vld [vmem:[#allocation7 + $0x220] sm:$0xff]
    %v183 = vld [vmem:[#allocation7 + $0x228] sm:$0xff]
    %v184 = vld [vmem:[#allocation7 + $0x230] sm:$0xff]
    %v185 = vld [vmem:[#allocation7 + $0x238] sm:$0xff]
    %v186 = vld [vmem:[#allocation7 + $0x240] sm:$0xff]
    %v187 = vld [vmem:[#allocation7 + $0x248] sm:$0xff]
    %v188 = vld [vmem:[#allocation7 + $0x250] sm:$0xff]
    %v189 = vld [vmem:[#allocation7 + $0x258] sm:$0xff]
    %v190 = vld [vmem:[#allocation7 + $0x260] sm:$0xff]
    %v191 = vld [vmem:[#allocation7 + $0x268] sm:$0xff]
    %v192 = vld [vmem:[#allocation7 + $0x270] sm:$0xff]
    %v193 = vld [vmem:[#allocation7 + $0x278] sm:$0xff]
    %v194 = vld [vmem:[#allocation7 + $0x280] sm:$0xff]
    %v195 = vld [vmem:[#allocation7 + $0x288] sm:$0xff]
    %v196 = vld [vmem:[#allocation7 + $0x290] sm:$0xff]
    %v197 = vld [vmem:[#allocation7 + $0x298] sm:$0xff]
    %v198 = vld [vmem:[#allocation7 + $0x2a0] sm:$0xff]
    %v199 = vld [vmem:[#allocation7 + $0x2a8] sm:$0xff]
    %v200 = vld [vmem:[#allocation7 + $0x2b0] sm:$0xff]
    %v201 = vld [vmem:[#allocation7 + $0x2b8] sm:$0xff]
    %v202 = vld [vmem:[#allocation7 + $0x2c0] sm:$0xff]
    %v203 = vld [vmem:[#allocation7 + $0x2c8] sm:$0xff]
    %v204 = vld [vmem:[#allocation7 + $0x2d0] sm:$0xff]
    %v205 = vld [vmem:[#allocation7 + $0x2d8] sm:$0xff]
    %v206 = vld [vmem:[#allocation7 + $0x2e0] sm:$0xff]
    %v207 = vld [vmem:[#allocation7 + $0x2e8] sm:$0xff]
    %v208 = vld [vmem:[#allocation7 + $0x2f0] sm:$0xff]
    %v209 = vld [vmem:[#allocation7 + $0x2f8] sm:$0xff]
    %v210 = vld [vmem:[#allocation7 + $0x300] sm:$0xff]
    %v211 = vld [vmem:[#allocation7 + $0x308] sm:$0xff]
    %v212 = vld [vmem:[#allocation7 + $0x310] sm:$0xff]
    %v213 = vld [vmem:[#allocation7 + $0x318] sm:$0xff]
    %v214 = vld [vmem:[#allocation7 + $0x320] sm:$0xff]
    %v215 = vld [vmem:[#allocation7 + $0x328] sm:$0xff]
    %v216 = vld [vmem:[#allocation7 + $0x330] sm:$0xff]
    %v217 = vld [vmem:[#allocation7 + $0x338] sm:$0xff]
    %v218 = vld [vmem:[#allocation7 + $0x340] sm:$0xff]
    %v219 = vld [vmem:[#allocation7 + $0x348] sm:$0xff]
    %v220 = vld [vmem:[#allocation7 + $0x350] sm:$0xff]
    %v221 = vld [vmem:[#allocation7 + $0x358] sm:$0xff]
    %v222 = vld [vmem:[#allocation7 + $0x360] sm:$0xff]
    %v223 = vld [vmem:[#allocation7 + $0x368] sm:$0xff]
    %v224 = vld [vmem:[#allocation7 + $0x370] sm:$0xff]
    %v225 = vld [vmem:[#allocation7 + $0x378] sm:$0xff]
    %v226 = vld [vmem:[#allocation8] sm:$0xff]
    %v228 = vperm.slane %v226, 0
    %v229 = vperm.slane %v226, 1
    %v230 = vperm.slane %v226, 2
    %v231 = vperm.slane %v226, 3
    %v232 = vperm.slane %v226, 4
    %v233 = vperm.slane %v226, 5
    %v234 = vperm.slane %v226, 6
    %242 = vmatpush.msra.mxu0 %v219
    %243 = vmatpush.msra.mxu0 %v212
    %244 = vmatpush.msra.mxu0 %v205
    %245 = vmatpush.msra.mxu0 %v198
    %246 = vmatpush.msra.mxu0 %v191
    %247 = vmatpush.msra.mxu0 %v184
    %248 = vmatpush.msra.mxu0 %v177
    %249 = vmatpush.msra.mxu0 %v170
    %250 = vmatpush.msra.mxu0 %v163
    %251 = vmatpush.msra.mxu0 %v156
    %252 = vmatpush.msra.mxu0 %v149
    %253 = vmatpush.msra.mxu0 %v142
    %254 = vmatpush.msra.mxu0 %v135
    %255 = vmatpush.msra.mxu0 %v128
    %256 = vmatpush.msra.mxu0 %v121
    %257 = vmatpush.msra.mxu0 %v114
    %258 = vmatmul.f32.gmra.mxu0 %v113
    %v259 = vpop.f32.mrf.mxu0
    %v260 = vadd.f32 %v228, %v259
    %261 = vdwg.mxu0
    %262 = vmatpush.msra.mxu0 %v220
    %263 = vmatpush.msra.mxu0 %v213
    %264 = vmatpush.msra.mxu0 %v206
    %265 = vmatpush.msra.mxu0 %v199
    %266 = vmatpush.msra.mxu0 %v192
    %267 = vmatpush.msra.mxu0 %v185
    %268 = vmatpush.msra.mxu0 %v178
    %269 = vmatpush.msra.mxu0 %v171
    %270 = vmatpush.msra.mxu0 %v164
    %271 = vmatpush.msra.mxu0 %v157
    %272 = vmatpush.msra.mxu0 %v150
    %273 = vmatpush.msra.mxu0 %v143
    %274 = vmatpush.msra.mxu0 %v136
    %275 = vmatpush.msra.mxu0 %v129
    %276 = vmatpush.msra.mxu0 %v122
    %277 = vmatpush.msra.mxu0 %v115
    %278 = vmatmul.f32.gmra.mxu0 %v113
    %v279 = vpop.f32.mrf.mxu0
    %v280 = vadd.f32 %v229, %v279
    %281 = vdwg.mxu0
    %282 = vmatpush.msra.mxu0 %v221
    %283 = vmatpush.msra.mxu0 %v214
    %284 = vmatpush.msra.mxu0 %v207
    %285 = vmatpush.msra.mxu0 %v200
    %286 = vmatpush.msra.mxu0 %v193
    %287 = vmatpush.msra.mxu0 %v186
    %288 = vmatpush.msra.mxu0 %v179
    %289 = vmatpush.msra.mxu0 %v172
    %290 = vmatpush.msra.mxu0 %v165
    %291 = vmatpush.msra.mxu0 %v158
    %292 = vmatpush.msra.mxu0 %v151
    %293 = vmatpush.msra.mxu0 %v144
    %294 = vmatpush.msra.mxu0 %v137
    %295 = vmatpush.msra.mxu0 %v130
    %296 = vmatpush.msra.mxu0 %v123
    %297 = vmatpush.msra.mxu0 %v116
    %298 = vmatmul.f32.gmra.mxu0 %v113
    %v299 = vpop.f32.mrf.mxu0
    %v300 = vadd.f32 %v230, %v299
    %301 = vdwg.mxu0
    %302 = vmatpush.msra.mxu0 %v222
    %303 = vmatpush.msra.mxu0 %v215
    %304 = vmatpush.msra.mxu0 %v208
    %305 = vmatpush.msra.mxu0 %v201
    %306 = vmatpush.msra.mxu0 %v194
    %307 = vmatpush.msra.mxu0 %v187
    %308 = vmatpush.msra.mxu0 %v180
    %309 = vmatpush.msra.mxu0 %v173
    %310 = vmatpush.msra.mxu0 %v166
    %311 = vmatpush.msra.mxu0 %v159
    %312 = vmatpush.msra.mxu0 %v152
    %313 = vmatpush.msra.mxu0 %v145
    %314 = vmatpush.msra.mxu0 %v138
    %315 = vmatpush.msra.mxu0 %v131
    %316 = vmatpush.msra.mxu0 %v124
    %317 = vmatpush.msra.mxu0 %v117
    %318 = vmatmul.f32.gmra.mxu0 %v113
    %v319 = vpop.f32.mrf.mxu0
    %v320 = vadd.f32 %v231, %v319
    %321 = vdwg.mxu0
    %322 = vmatpush.msra.mxu0 %v223
    %323 = vmatpush.msra.mxu0 %v216
    %324 = vmatpush.msra.mxu0 %v209
    %325 = vmatpush.msra.mxu0 %v202
    %326 = vmatpush.msra.mxu0 %v195
    %327 = vmatpush.msra.mxu0 %v188
    %328 = vmatpush.msra.mxu0 %v181
    %329 = vmatpush.msra.mxu0 %v174
    %330 = vmatpush.msra.mxu0 %v167
    %331 = vmatpush.msra.mxu0 %v160
    %332 = vmatpush.msra.mxu0 %v153
    %333 = vmatpush.msra.mxu0 %v146
    %334 = vmatpush.msra.mxu0 %v139
    %335 = vmatpush.msra.mxu0 %v132
    %336 = vmatpush.msra.mxu0 %v125
    %337 = vmatpush.msra.mxu0 %v118
    %338 = vmatmul.f32.gmra.mxu0 %v113
    %v339 = vpop.f32.mrf.mxu0
    %v340 = vadd.f32 %v232, %v339
    %341 = vdwg.mxu0
    %342 = vmatpush.msra.mxu0 %v224
    %343 = vmatpush.msra.mxu0 %v217
    %344 = vmatpush.msra.mxu0 %v210
    %345 = vmatpush.msra.mxu0 %v203
    %346 = vmatpush.msra.mxu0 %v196
    %347 = vmatpush.msra.mxu0 %v189
    %348 = vmatpush.msra.mxu0 %v182
    %349 = vmatpush.msra.mxu0 %v175
    %350 = vmatpush.msra.mxu0 %v168
    %351 = vmatpush.msra.mxu0 %v161
    %352 = vmatpush.msra.mxu0 %v154
    %353 = vmatpush.msra.mxu0 %v147
    %354 = vmatpush.msra.mxu0 %v140
    %355 = vmatpush.msra.mxu0 %v133
    %356 = vmatpush.msra.mxu0 %v126
    %357 = vmatpush.msra.mxu0 %v119
    %358 = vmatmul.f32.gmra.mxu0 %v113
    %v359 = vpop.f32.mrf.mxu0
    %v360 = vadd.f32 %v233, %v359
    %361 = vdwg.mxu0
    %362 = vmatpush.msra.mxu0 %v225
    %363 = vmatpush.msra.mxu0 %v218
    %364 = vmatpush.msra.mxu0 %v211
    %365 = vmatpush.msra.mxu0 %v204
    %366 = vmatpush.msra.mxu0 %v197
    %367 = vmatpush.msra.mxu0 %v190
    %368 = vmatpush.msra.mxu0 %v183
    %369 = vmatpush.msra.mxu0 %v176
    %370 = vmatpush.msra.mxu0 %v169
    %371 = vmatpush.msra.mxu0 %v162
    %372 = vmatpush.msra.mxu0 %v155
    %373 = vmatpush.msra.mxu0 %v148
    %374 = vmatpush.msra.mxu0 %v141
    %375 = vmatpush.msra.mxu0 %v134
    %376 = vmatpush.msra.mxu0 %v127
    %377 = vmatpush.msra.mxu0 %v120
    %378 = vmatmul.f32.gmra.mxu0 %v113
    %v379 = vpop.f32.mrf.mxu0
    %v380 = vadd.f32 %v234, %v379
    %381 = vdwg.mxu0
    %v382 = vsub.f32 0.0, %v260
    %v383 = vsub.f32 0.0, %v280
    %v384 = vsub.f32 0.0, %v300
    %v385 = vsub.f32 0.0, %v320
    %v386 = vsub.f32 0.0, %v340
    %v387 = vsub.f32 0.0, %v360
    %v388 = vsub.f32 0.0, %v380
    %v389 = vmul.f32 %v382, 1.442695
    %v390 = vpow.pop %v389
    %v391 = vmul.f32 %v383, 1.442695
    %v392 = vpow.pop %v391
    %v393 = vmul.f32 %v384, 1.442695
    %v394 = vpow.pop %v393
    %v395 = vmul.f32 %v385, 1.442695
    %v396 = vpow.pop %v395
    %v397 = vmul.f32 %v386, 1.442695
    %v398 = vpow.pop %v397
    %v399 = vmul.f32 %v387, 1.442695
    %v400 = vpow.pop %v399
    %v401 = vmul.f32 %v388, 1.442695
    %v402 = vpow.pop %v401
    %v403 = vadd.f32 %v390, 1.0
    %v404 = vadd.f32 %v392, 1.0
    %v405 = vadd.f32 %v394, 1.0
    %v406 = vadd.f32 %v396, 1.0
    %v407 = vadd.f32 %v398, 1.0
    %v408 = vadd.f32 %v400, 1.0
    %v409 = vadd.f32 %v402, 1.0
    %v410 = vrcp.pop %v403
    %v411 = vrcp.pop %v404
    %v412 = vrcp.pop %v405
    %v413 = vrcp.pop %v406
    %v414 = vrcp.pop %v407
    %v415 = vrcp.pop %v408
    %v416 = vrcp.pop %v409
    %417 = vst [vmem:[#allocation10] sm:$0xff] %v410
    %418 = vst [vmem:[#allocation10 + $0x8] sm:$0xff] %v411
    %419 = vst [vmem:[#allocation10 + $0x10] sm:$0xff] %v412
    %420 = vst [vmem:[#allocation10 + $0x18] sm:$0xff] %v413
    %421 = vst [vmem:[#allocation10 + $0x20] sm:$0xff] %v414
    %422 = vst [vmem:[#allocation10 + $0x28] sm:$0xff] %v415
    %423 = vst [vmem:[#allocation10 + $0x30] sm:$0xff] %v416
    // Predicated region
    $region38: #{tpu_custom_call.1} parent=1 // pred_check
      _
    $region39: #{tpu_custom_call.1} parent=1 // pred_check_branch
      %425 = sbr.rel (0) target = $region41
    $region40: #{tpu_custom_call.1} parent=1 // pred_region
      %427 = vsyncadd [#allocation4], 0
      %s429 = sshll.u32 [#allocation10], 4
      %s430 = int_to_ptr.vmem [resolvable:$true] %s429
      %s431 = sshll.u32 %s5, 4
      %s432 = int_to_ptr.hbm [resolvable:$true] %s431
      %434 = dma.vmem_to_hbm [thread:$0]  %s430, 896, %s432, [#allocation4]
    $region41: #{tpu_custom_call.1} parent=1 // pred_fallthru
      _
    // Predicated region
    $region42: #{tpu_custom_call.1} parent=1 // pred_check
      _
    $region43: #{tpu_custom_call.1} parent=1 // pred_check_branch
      %436 = sbr.rel (0) target = $region45
    $region44: #{tpu_custom_call.1} parent=1 // pred_region
      %438 = dma.done [#allocation4], 896
    $region45: #{tpu_custom_call.1} parent=1 // pred_fallthru
      _
    %439 = vsyncpa [#allocation3], 1
    %440 = vsyncpa [#allocation6], 1
    %441 = vsyncpa [#allocation9], 1
    %442 = vsyncpa [#allocation4], 1

</llo_original>
